<compile_context>
chip_gen: v5e
topology: v5e:2x2
jax: 0.10.0
libtpu: 0.0.40
codegen_flags: <defaults>
</compile_context>

<pallas_src>
import functools

import jax
import jax.numpy as jnp
from jax.experimental import pallas as pl
from jax.experimental.pallas import tpu as pltpu

HIDDEN = 128
OUT = 21


def _round_up(x, m):
    return ((x + m - 1) // m) * m


def qnet_kernel(x_ref, w1_ref, w_ref, b_ref, o_ref):
    cdt = w_ref.dtype
    # f32 -> bf16 cast in-kernel (cheap VPU op, hidden under the input DMA)
    x = x_ref[...].astype(cdt)
    # fc1 + relu : (tb, nS) x (nS, 128) -> f32 MXU accumulation (Mosaic pads K internally)
    h = jnp.dot(x, w1_ref[...], preferred_element_type=jnp.float32)
    h = jnp.maximum(h + b_ref[0], 0.0)
    # fc2 + relu
    h = jnp.dot(h.astype(cdt), w_ref[0], preferred_element_type=jnp.float32)
    h = jnp.maximum(h + b_ref[1], 0.0)
    # fc3 + relu
    h = jnp.dot(h.astype(cdt), w_ref[1], preferred_element_type=jnp.float32)
    h = jnp.maximum(h + b_ref[2], 0.0)
    # fc4 (output lanes zero-padded 21 -> 128 so the store is a dense 128-lane vst)
    y = jnp.dot(h.astype(cdt), w_ref[2], preferred_element_type=jnp.float32)
    o_ref[...] = (y + b_ref[3]).astype(o_ref.dtype)


def _choose_tile(B, nS, block_b):
    """Batch tile: big enough to amortize ~0.35us/step, capped by a conservative
    VMEM budget (double-buffered f32 x + f32 out tiles) and by a >=4-step rule for
    v7x megacore when the batch is large."""
    align = 16 if B >= 16 else 8          # all streamed arrays are f32 -> 8 is safe; 16 for headroom
    tb = _round_up(min(block_b, max(B, 1)), align)
    per_row_bytes = 4 * (nS + HIDDEN)     # x f32 row + output f32 row, per buffer
    vmem_budget = 24 * 1024 * 1024        # leave headroom inside the 32 MiB scoped limit
    tb_vmem = max(align, (vmem_budget // (2 * per_row_bytes)) // align * align)
    tb = min(tb, tb_vmem)
    if B >= 4 * 2048:
        # keep >= 4 grid steps so a v7x megacore gets >= 2 pipelined steps per TC;
        # tiles stay >= 2048 rows so single-TC v5e/v6e amortization is unaffected.
        tb = min(tb, _round_up(pl.cdiv(B, 4), align))
    return max(tb, align)


@functools.partial(jax.jit, static_argnames=("block_b", "compute_dtype"))
def qnet_forward(x, params, *, block_b=8192, compute_dtype=jnp.bfloat16):
    """x: (B, nS) float32.  params: w1..w4 stored (in, out), b1..b4 stored (1, out)."""
    B, nS = x.shape
    cdt = compute_dtype

    tb = _choose_tile(B, nS, block_b)
    grid_b = pl.cdiv(B, tb)

    # ---- resident weight / bias slabs (tiny; zero padding keeps the math identical) ----
    w1 = params["w1"].astype(cdt)                                               # (nS, 128)
    w4 = jnp.zeros((HIDDEN, HIDDEN), cdt).at[:, :OUT].set(params["w4"].astype(cdt))
    w234 = jnp.stack([params["w2"].astype(cdt), params["w3"].astype(cdt), w4])  # (3,128,128)
    b4 = jnp.zeros((1, HIDDEN), jnp.float32).at[:, :OUT].set(params["b4"])
    b_all = jnp.stack([params["b1"], params["b2"], params["b3"], b4])           # (4,1,128) f32

    in_specs = [
        pl.BlockSpec((tb, nS), lambda i: (i, 0)),                # x streamed, unpadded f32
        pl.BlockSpec((nS, HIDDEN), lambda i: (0, 0)),            # w1      (resident)
        pl.BlockSpec((3, HIDDEN, HIDDEN), lambda i: (0, 0, 0)),  # w2..w4  (resident)
        pl.BlockSpec((4, 1, HIDDEN), lambda i: (0, 0, 0)),       # b1..b4  (resident)
    ]
    out_spec = pl.BlockSpec((tb, HIDDEN), lambda i: (i, 0))

    flops = 2 * B * HIDDEN * (nS + 3 * HIDDEN)
    bytes_accessed = (B * nS * 4 + B * HIDDEN * 4
                      + (nS * HIDDEN + 3 * HIDDEN * HIDDEN) * 2 + 4 * HIDDEN * 4)

    out = pl.pallas_call(
        qnet_kernel,
        out_shape=jax.ShapeDtypeStruct((B, HIDDEN), jnp.float32),
        grid_spec=pltpu.PrefetchScalarGridSpec(
            num_scalar_prefetch=0,
            grid=(grid_b,),
            in_specs=in_specs,
            out_specs=out_spec,
        ),
        compiler_params=pltpu.CompilerParams(
            dimension_semantics=("parallel",),
            vmem_limit_bytes=32 * 1024 * 1024,
        ),
        cost_estimate=pl.CostEstimate(
            flops=flops, transcendentals=0, bytes_accessed=bytes_accessed),
    )(x, w1, w234, b_all)

    # TODO(synk): callers that only argmax over actions could consume the padded slab
    # directly (or a bf16 slab) and skip this extra slice pass; kept f32 + sliced here
    # to match the PyTorch forward exactly.
    return out[:, :OUT]


def init_params(key, nS):
    """Deterministic Kaiming-uniform weights (bound = sqrt(6/fan_in)), zero biases,
    matching torch.nn.init.kaiming_uniform_ + constant_(bias, 0)."""
    dims = [(nS, HIDDEN), (HIDDEN, HIDDEN), (HIDDEN, HIDDEN), (HIDDEN, OUT)]
    params = {}
    for idx, (fan_in, fan_out) in enumerate(dims, start=1):
        key, sub = jax.random.split(key)
        bound = (6.0 / fan_in) ** 0.5
        params[f"w{idx}"] = jax.random.uniform(
            sub, (fan_in, fan_out), jnp.float32, minval=-bound, maxval=bound)
        params[f"b{idx}"] = jnp.zeros((1, fan_out), jnp.float32)
    return params


def qnet_ref(x, params, compute_dtype=jnp.bfloat16):
    """Pure-JAX reference mirroring the kernel arithmetic (bf16 operands, f32 accumulation)."""
    cdt = compute_dtype

    def linear(h, w, b):
        return jnp.dot(h.astype(cdt), w.astype(cdt),
                       preferred_element_type=jnp.float32) + b

    h = jnp.maximum(linear(x, params["w1"], params["b1"]), 0.0)
    h = jnp.maximum(linear(h, params["w2"], params["b2"]), 0.0)
    h = jnp.maximum(linear(h, params["w3"], params["b3"]), 0.0)
    return linear(h, params["w4"], params["b4"])


if __name__ == "__main__":
    key = jax.random.PRNGKey(0)
    nS = 32      # small state dimension
    B = 8        # small batch
    kx, kp = jax.random.split(key)
    x = jax.random.normal(kx, (B, nS), jnp.float32)
    params = init_params(kp, nS)

    out = qnet_forward(x, params)
    out = jax.block_until_ready(out)
    assert out.shape == (B, OUT)

    # exact check vs a reference that mirrors the kernel arithmetic (bf16 in, f32 accum)
    ref = qnet_ref(x, params)
    assert jnp.allclose(out, ref, atol=2e-3, rtol=2e-3), "mismatch vs JAX reference"
    # sanity check vs full-f32 math (bf16 streaming introduces only small drift)
    ref32 = qnet_ref(x, params, compute_dtype=jnp.float32)
    assert jnp.allclose(out, ref32, atol=1e-1, rtol=1e-1), "bf16 drift too large"

    # ragged-batch path (last block partially masked; padded rows never mixed in)
    B2 = 10
    x2 = jax.random.normal(jax.random.PRNGKey(1), (B2, nS), jnp.float32)
    out2 = jax.block_until_ready(qnet_forward(x2, params))
    assert out2.shape == (B2, OUT)
    assert jnp.allclose(out2, qnet_ref(x2, params), atol=2e-3, rtol=2e-3), "ragged mismatch"

    print("KERNEL_OK")
</pallas_src>

<mosaic_0001>
module attributes {stable_mosaic.version = 11 : i64} {
  func.func @qnet_kernel(%arg0: i32, %arg1: memref<8x32xf32, #tpu.memory_space<vmem>>, %arg2: memref<32x128xbf16, #tpu.memory_space<vmem>>, %arg3: memref<3x128x128xbf16, #tpu.memory_space<vmem>>, %arg4: memref<4x1x128xf32, #tpu.memory_space<vmem>>, %arg5: memref<8x128xf32, #tpu.memory_space<vmem>>) attributes {dimension_semantics = [#tpu.dimension_semantics<parallel>], iteration_bounds = array<i64: 1>, scalar_prefetch = 0 : i64, scratch_operands = 0 : i64, tpu.core_type = #tpu.core_type<tc>, window_params = [{transform_indices = @transform_0, window_bounds = array<i64: 8, 32>}, {pipeline_mode = #tpu.pipeline_mode<synchronous>, transform_indices = @transform_1, window_bounds = array<i64: 32, 128>}, {pipeline_mode = #tpu.pipeline_mode<synchronous>, transform_indices = @transform_2, window_bounds = array<i64: 3, 128, 128>}, {pipeline_mode = #tpu.pipeline_mode<synchronous>, transform_indices = @transform_3, window_bounds = array<i64: 4, 1, 128>}, {transform_indices = @transform_4, window_bounds = array<i64: 8, 128>}]} {
    %c0 = arith.constant 0 : index
    %c0_0 = arith.constant 0 : index
    %0 = vector.load %arg1[%c0, %c0_0] : memref<8x32xf32, #tpu.memory_space<vmem>>, vector<8x32xf32>
    %1 = arith.truncf %0 : vector<8x32xf32> to vector<8x32xbf16>
    %c0_1 = arith.constant 0 : index
    %c0_2 = arith.constant 0 : index
    %2 = vector.load %arg2[%c0_1, %c0_2] : memref<32x128xbf16, #tpu.memory_space<vmem>>, vector<32x128xbf16>
    %cst = arith.constant dense<0.000000e+00> : vector<8x128xf32>
    %3 = tpu.matmul %1, %2, %cst {dimension_numbers = #tpu.dot_dimension_numbers<[1], [0], [0], [1], [0, 0, 1, 1], [], []>} : vector<8x32xbf16>, vector<32x128xbf16>, vector<8x128xf32> -> vector<8x128xf32>
    %c0_3 = arith.constant 0 : index
    %c0_4 = arith.constant 0 : index
    %c0_5 = arith.constant 0 : index
    %4 = vector.load %arg4[%c0_3, %c0_4, %c0_5] : memref<4x1x128xf32, #tpu.memory_space<vmem>>, vector<1x1x128xf32>
    %5 = vector.shape_cast %4 : vector<1x1x128xf32> to vector<1x128xf32>
    %6 = vector.broadcast %5 : vector<1x128xf32> to vector<8x128xf32>
    %7 = arith.addf %3, %6 : vector<8x128xf32>
    %cst_6 = arith.constant 0.000000e+00 : f32
    %8 = vector.broadcast %cst_6 : f32 to vector<8x128xf32>
    %9 = arith.maximumf %7, %8 : vector<8x128xf32>
    %10 = arith.truncf %9 : vector<8x128xf32> to vector<8x128xbf16>
    %c0_7 = arith.constant 0 : index
    %c0_8 = arith.constant 0 : index
    %c0_9 = arith.constant 0 : index
    %11 = vector.load %arg3[%c0_7, %c0_8, %c0_9] : memref<3x128x128xbf16, #tpu.memory_space<vmem>>, vector<1x128x128xbf16>
    %12 = vector.shape_cast %11 : vector<1x128x128xbf16> to vector<128x128xbf16>
    %cst_10 = arith.constant dense<0.000000e+00> : vector<8x128xf32>
    %13 = tpu.matmul %10, %12, %cst_10 {dimension_numbers = #tpu.dot_dimension_numbers<[1], [0], [0], [1], [0, 0, 1, 1], [], []>} : vector<8x128xbf16>, vector<128x128xbf16>, vector<8x128xf32> -> vector<8x128xf32>
    %c1 = arith.constant 1 : index
    %c0_11 = arith.constant 0 : index
    %c0_12 = arith.constant 0 : index
    %14 = vector.load %arg4[%c1, %c0_11, %c0_12] : memref<4x1x128xf32, #tpu.memory_space<vmem>>, vector<1x1x128xf32>
    %15 = vector.shape_cast %14 : vector<1x1x128xf32> to vector<1x128xf32>
    %16 = vector.broadcast %15 : vector<1x128xf32> to vector<8x128xf32>
    %17 = arith.addf %13, %16 : vector<8x128xf32>
    %cst_13 = arith.constant 0.000000e+00 : f32
    %18 = vector.broadcast %cst_13 : f32 to vector<8x128xf32>
    %19 = arith.maximumf %17, %18 : vector<8x128xf32>
    %20 = arith.truncf %19 : vector<8x128xf32> to vector<8x128xbf16>
    %c1_14 = arith.constant 1 : index
    %c0_15 = arith.constant 0 : index
    %c0_16 = arith.constant 0 : index
    %21 = vector.load %arg3[%c1_14, %c0_15, %c0_16] : memref<3x128x128xbf16, #tpu.memory_space<vmem>>, vector<1x128x128xbf16>
    %22 = vector.shape_cast %21 : vector<1x128x128xbf16> to vector<128x128xbf16>
    %cst_17 = arith.constant dense<0.000000e+00> : vector<8x128xf32>
    %23 = tpu.matmul %20, %22, %cst_17 {dimension_numbers = #tpu.dot_dimension_numbers<[1], [0], [0], [1], [0, 0, 1, 1], [], []>} : vector<8x128xbf16>, vector<128x128xbf16>, vector<8x128xf32> -> vector<8x128xf32>
    %c2 = arith.constant 2 : index
    %c0_18 = arith.constant 0 : index
    %c0_19 = arith.constant 0 : index
    %24 = vector.load %arg4[%c2, %c0_18, %c0_19] : memref<4x1x128xf32, #tpu.memory_space<vmem>>, vector<1x1x128xf32>
    %25 = vector.shape_cast %24 : vector<1x1x128xf32> to vector<1x128xf32>
    %26 = vector.broadcast %25 : vector<1x128xf32> to vector<8x128xf32>
    %27 = arith.addf %23, %26 : vector<8x128xf32>
    %cst_20 = arith.constant 0.000000e+00 : f32
    %28 = vector.broadcast %cst_20 : f32 to vector<8x128xf32>
    %29 = arith.maximumf %27, %28 : vector<8x128xf32>
    %30 = arith.truncf %29 : vector<8x128xf32> to vector<8x128xbf16>
    %c2_21 = arith.constant 2 : index
    %c0_22 = arith.constant 0 : index
    %c0_23 = arith.constant 0 : index
    %31 = vector.load %arg3[%c2_21, %c0_22, %c0_23] : memref<3x128x128xbf16, #tpu.memory_space<vmem>>, vector<1x128x128xbf16>
    %32 = vector.shape_cast %31 : vector<1x128x128xbf16> to vector<128x128xbf16>
    %cst_24 = arith.constant dense<0.000000e+00> : vector<8x128xf32>
    %33 = tpu.matmul %30, %32, %cst_24 {dimension_numbers = #tpu.dot_dimension_numbers<[1], [0], [0], [1], [0, 0, 1, 1], [], []>} : vector<8x128xbf16>, vector<128x128xbf16>, vector<8x128xf32> -> vector<8x128xf32>
    %c3 = arith.constant 3 : index
    %c0_25 = arith.constant 0 : index
    %c0_26 = arith.constant 0 : index
    %34 = vector.load %arg4[%c3, %c0_25, %c0_26] : memref<4x1x128xf32, #tpu.memory_space<vmem>>, vector<1x1x128xf32>
    %35 = vector.shape_cast %34 : vector<1x1x128xf32> to vector<1x128xf32>
    %36 = vector.broadcast %35 : vector<1x128xf32> to vector<8x128xf32>
    %37 = arith.addf %33, %36 : vector<8x128xf32>
    %c0_27 = arith.constant 0 : index
    %c0_28 = arith.constant 0 : index
    %38 = vector.load %arg5[%c0_27, %c0_28] : memref<8x128xf32, #tpu.memory_space<vmem>>, vector<8x128xf32>
    tpu.vector_store %arg5[%c0_27, %c0_28], %37 {strides = array<i32>} : memref<8x128xf32, #tpu.memory_space<vmem>>, vector<8x128xf32>,
    return
  }
  func.func @transform_0(%arg0: i32) -> (i32, i32) {
    %c0_i32 = arith.constant 0 : i32
    %c0_i32_0 = arith.constant 0 : i32
    return %arg0, %c0_i32 : i32, i32
  }
  func.func @transform_1(%arg0: i32) -> (i32, i32) {
    %c0_i32 = arith.constant 0 : i32
    %c0_i32_0 = arith.constant 0 : i32
    %c0_i32_1 = arith.constant 0 : i32
    return %c0_i32, %c0_i32_0 : i32, i32
  }
  func.func @transform_2(%arg0: i32) -> (i32, i32, i32) {
    %c0_i32 = arith.constant 0 : i32
    %c0_i32_0 = arith.constant 0 : i32
    %c0_i32_1 = arith.constant 0 : i32
    %c0_i32_2 = arith.constant 0 : i32
    return %c0_i32, %c0_i32_0, %c0_i32_1 : i32, i32, i32
  }
  func.func @transform_3(%arg0: i32) -> (i32, i32, i32) {
    %c0_i32 = arith.constant 0 : i32
    %c0_i32_0 = arith.constant 0 : i32
    %c0_i32_1 = arith.constant 0 : i32
    %c0_i32_2 = arith.constant 0 : i32
    return %c0_i32, %c0_i32_0, %c0_i32_1 : i32, i32, i32
  }
  func.func @transform_4(%arg0: i32) -> (i32, i32) {
    %c0_i32 = arith.constant 0 : i32
    %c0_i32_0 = arith.constant 0 : i32
    return %arg0, %c0_i32 : i32, i32
  }
}

</mosaic_0001>

<llo_original>
// kernel: qnet_forward.1
$region0: #{qnet_forward.1}
  #allocation0 [shape = 'u32[]', space=smem, size = 0x4, offset = 0x4, fixed_abs, tag = 'smem constant byte address 0x4 - core index']
  #allocation1 [shape = 'u32[72,128]{1,0:T(1,128)}', space=vmem, size = 0x9000, scoped, tag = 'internal scratch']
  %s0 = inlined_call_operand.vmem [shape: f32[8,32], index: 0, kind: input, shape index: {}]
  %s1 = inlined_call_operand.vmem [shape: bf16[32,128], index: 1, kind: input, shape index: {}]
  %s2 = inlined_call_operand.vmem [shape: bf16[3,128,128], index: 2, kind: input, shape index: {}]
  %s3 = inlined_call_operand.vmem [shape: f32[4,1,128], index: 3, kind: input, shape index: {}]
  %s4 = inlined_call_operand.hbm [shape: f32[8,128], index: 4, kind: output, shape index: {}]
  %s5 = sld [smem:[#allocation0]]
  $region26: #{qnet_forward.1} parent=0
    _
  %s7 = ssub.s32 1, %s5
  %s8 = scalar_select 0, %s7, %s5
  $region1: #{qnet_forward.1} parent=0
    #allocation2 [shape = 'u8[4096]{0}', space=vmem, size = 0x1000, scoped, tag = 'output window, operand 0, single buffered']
    #allocation3 [shape = 's32[1]{0}', space=sflag, size = 0x4, scoped, tag = 'scoped memory for qnet_forward.1']
    %9 = vsyncpa [#allocation3], 0
    // Predicated region
    $region2: #{qnet_forward.1} parent=1 // pred_check
      _
    $region3: #{qnet_forward.1} parent=1 // pred_check_branch
      %11 = sbr.rel (0) target = $region5
    $region4: #{qnet_forward.1} parent=1 // pred_region
      _
    $region5: #{qnet_forward.1} parent=1 // pred_fallthru
      _
    // Predicated region
    $region6: #{qnet_forward.1} parent=1 // pred_check
      _
    $region7: #{qnet_forward.1} parent=1 // pred_check_branch
      %13 = sbr.rel (0) target = $region9
    $region8: #{qnet_forward.1} parent=1 // pred_region
      _
    $region9: #{qnet_forward.1} parent=1 // pred_fallthru
      _
    // Predicated region
    $region10: #{qnet_forward.1} parent=1 // pred_check
      _
    $region11: #{qnet_forward.1} parent=1 // pred_check_branch
      %15 = sbr.rel (0) target = $region13
    $region12: #{qnet_forward.1} parent=1 // pred_region
      _
    $region13: #{qnet_forward.1} parent=1 // pred_fallthru
      _
    // Predicated region
    $region14: #{qnet_forward.1} parent=1 // pred_check
      _
    $region15: #{qnet_forward.1} parent=1 // pred_check_branch
      %17 = sbr.rel (0) target = $region17
    $region16: #{qnet_forward.1} parent=1 // pred_region
      _
    $region17: #{qnet_forward.1} parent=1 // pred_fallthru
      _
    %v19 = vld [vmem:[%s0] sm:$0xff]
    %v20 = vpack.c.bf16 %v19, %v19
    %v21 = vld [vmem:[%s1] sm:$0xf]
    %v22 = vld [vmem:[%s1 + $0x4] sm:$0xf]
    %v23 = vld [vmem:[%s1 + $0x8] sm:$0xf]
    %v24 = vld [vmem:[%s1 + $0xc] sm:$0xf]
    %v25 = vld [vmem:[%s3] sm:$0x1]
    %v27 = vperm.slane %v25, 0
    %v33 = vunpack.c.l.b16 %v21
    %v34 = vunpack.c.l.b16 %v22
    %v35 = vunpack.c.l.b16 %v23
    %v36 = vunpack.c.l.b16 %v24
    %v37 = vpack.c.b16 %v34, %v33
    %v38 = vpack.c.b16 %v36, %v35
    %vm41 = vcmask 261120
    %v43 = vsel %vm41, %v20, 0
    %45 = vmatpush.bf16.msra.mxu0 0
    %46 = vmatpush.bf16.msra.mxu0 0
    %47 = vmatpush.bf16.msra.mxu0 0
    %48 = vmatpush.bf16.msra.mxu0 0
    %49 = vmatpush.bf16.msra.mxu0 0
    %50 = vmatpush.bf16.msra.mxu0 0
    %51 = vmatpush.bf16.msra.mxu0 %v38
    %52 = vmatpush.bf16.msra.mxu0 %v37
    %53 = vmatmul.bf16.gmra.mxu0 %v43
    %v54 = vpop.f32.mrf.mxu0
    %v55 = vadd.f32 %v27, %v54
    %v56 = vpop.f32.mrf.mxu0
    %57 = vdwg.mxu0
    %v58 = vmax.f32 %v55, 0.0
    %v59 = vpack.c.bf16 %v58, %v58
    %v60 = vld [vmem:[%s2] sm:$0xf]
    %v61 = vld [vmem:[%s2 + $0x4] sm:$0xf]
    %v62 = vld [vmem:[%s2 + $0x8] sm:$0xf]
    %v63 = vld [vmem:[%s2 + $0xc] sm:$0xf]
    %v64 = vld [vmem:[%s2 + $0x10] sm:$0xf]
    %v65 = vld [vmem:[%s2 + $0x14] sm:$0xf]
    %v66 = vld [vmem:[%s2 + $0x18] sm:$0xf]
    %v67 = vld [vmem:[%s2 + $0x1c] sm:$0xf]
    %v68 = vld [vmem:[%s2 + $0x20] sm:$0xf]
    %v69 = vld [vmem:[%s2 + $0x24] sm:$0xf]
    %v70 = vld [vmem:[%s2 + $0x28] sm:$0xf]
    %v71 = vld [vmem:[%s2 + $0x2c] sm:$0xf]
    %v72 = vld [vmem:[%s2 + $0x30] sm:$0xf]
    %v73 = vld [vmem:[%s2 + $0x34] sm:$0xf]
    %v74 = vld [vmem:[%s2 + $0x38] sm:$0xf]
    %v75 = vld [vmem:[%s2 + $0x3c] sm:$0xf]
    %s76 = scalar_lea.vmem %s3, 1
    %v77 = vld [vmem:[%s76] sm:$0x1]
    %v79 = vperm.slane %v77, 0
    %v97 = vunpack.c.l.b16 %v60
    %v98 = vunpack.c.l.b16 %v61
    %v99 = vunpack.c.l.b16 %v62
    %v100 = vunpack.c.l.b16 %v63
    %v101 = vunpack.c.l.b16 %v64
    %v102 = vunpack.c.l.b16 %v65
    %v103 = vunpack.c.l.b16 %v66
    %v104 = vunpack.c.l.b16 %v67
    %v105 = vunpack.c.l.b16 %v68
    %v106 = vunpack.c.l.b16 %v69
    %v107 = vunpack.c.l.b16 %v70
    %v108 = vunpack.c.l.b16 %v71
    %v109 = vunpack.c.l.b16 %v72
    %v110 = vunpack.c.l.b16 %v73
    %v111 = vunpack.c.l.b16 %v74
    %v112 = vunpack.c.l.b16 %v75
    %v113 = vpack.c.b16 %v98, %v97
    %v114 = vpack.c.b16 %v100, %v99
    %v115 = vpack.c.b16 %v102, %v101
    %v116 = vpack.c.b16 %v104, %v103
    %v117 = vpack.c.b16 %v106, %v105
    %v118 = vpack.c.b16 %v108, %v107
    %v119 = vpack.c.b16 %v110, %v109
    %v120 = vpack.c.b16 %v112, %v111
    %129 = vmatpush.bf16.msra.mxu0 %v120
    %130 = vmatpush.bf16.msra.mxu0 %v119
    %131 = vmatpush.bf16.msra.mxu0 %v118
    %132 = vmatpush.bf16.msra.mxu0 %v117
    %133 = vmatpush.bf16.msra.mxu0 %v116
    %134 = vmatpush.bf16.msra.mxu0 %v115
    %135 = vmatpush.bf16.msra.mxu0 %v114
    %136 = vmatpush.bf16.msra.mxu0 %v113
    %137 = vmatmul.bf16.gmra.mxu0 %v59
    %v138 = vpop.f32.mrf.mxu0
    %v139 = vadd.f32 %v79, %v138
    %v140 = vpop.f32.mrf.mxu0
    %141 = vdwg.mxu0
    %v142 = vmax.f32 %v139, 0.0
    %v143 = vpack.c.bf16 %v142, %v142
    %s144 = scalar_lea.vmem %s2, 64
    %v145 = vld [vmem:[%s144] sm:$0xf]
    %v146 = vld [vmem:[%s144 + $0x4] sm:$0xf]
    %v147 = vld [vmem:[%s144 + $0x8] sm:$0xf]
    %v148 = vld [vmem:[%s144 + $0xc] sm:$0xf]
    %v149 = vld [vmem:[%s144 + $0x10] sm:$0xf]
    %v150 = vld [vmem:[%s144 + $0x14] sm:$0xf]
    %v151 = vld [vmem:[%s144 + $0x18] sm:$0xf]
    %v152 = vld [vmem:[%s144 + $0x1c] sm:$0xf]
    %v153 = vld [vmem:[%s144 + $0x20] sm:$0xf]
    %v154 = vld [vmem:[%s144 + $0x24] sm:$0xf]
    %v155 = vld [vmem:[%s144 + $0x28] sm:$0xf]
    %v156 = vld [vmem:[%s144 + $0x2c] sm:$0xf]
    %v157 = vld [vmem:[%s144 + $0x30] sm:$0xf]
    %v158 = vld [vmem:[%s144 + $0x34] sm:$0xf]
    %v159 = vld [vmem:[%s144 + $0x38] sm:$0xf]
    %v160 = vld [vmem:[%s144 + $0x3c] sm:$0xf]
    %s161 = scalar_lea.vmem %s3, 2
    %v162 = vld [vmem:[%s161] sm:$0x1]
    %v164 = vperm.slane %v162, 0
    %v182 = vunpack.c.l.b16 %v145
    %v183 = vunpack.c.l.b16 %v146
    %v184 = vunpack.c.l.b16 %v147
    %v185 = vunpack.c.l.b16 %v148
    %v186 = vunpack.c.l.b16 %v149
    %v187 = vunpack.c.l.b16 %v150
    %v188 = vunpack.c.l.b16 %v151
    %v189 = vunpack.c.l.b16 %v152
    %v190 = vunpack.c.l.b16 %v153
    %v191 = vunpack.c.l.b16 %v154
    %v192 = vunpack.c.l.b16 %v155
    %v193 = vunpack.c.l.b16 %v156
    %v194 = vunpack.c.l.b16 %v157
    %v195 = vunpack.c.l.b16 %v158
    %v196 = vunpack.c.l.b16 %v159
    %v197 = vunpack.c.l.b16 %v160
    %v198 = vpack.c.b16 %v183, %v182
    %v199 = vpack.c.b16 %v185, %v184
    %v200 = vpack.c.b16 %v187, %v186
    %v201 = vpack.c.b16 %v189, %v188
    %v202 = vpack.c.b16 %v191, %v190
    %v203 = vpack.c.b16 %v193, %v192
    %v204 = vpack.c.b16 %v195, %v194
    %v205 = vpack.c.b16 %v197, %v196
    %214 = vmatpush.bf16.msra.mxu0 %v205
    %215 = vmatpush.bf16.msra.mxu0 %v204
    %216 = vmatpush.bf16.msra.mxu0 %v203
    %217 = vmatpush.bf16.msra.mxu0 %v202
    %218 = vmatpush.bf16.msra.mxu0 %v201
    %219 = vmatpush.bf16.msra.mxu0 %v200
    %220 = vmatpush.bf16.msra.mxu0 %v199
    %221 = vmatpush.bf16.msra.mxu0 %v198
    %222 = vmatmul.bf16.gmra.mxu0 %v143
    %v223 = vpop.f32.mrf.mxu0
    %v224 = vadd.f32 %v164, %v223
    %v225 = vpop.f32.mrf.mxu0
    %226 = vdwg.mxu0
    %v227 = vmax.f32 %v224, 0.0
    %v228 = vpack.c.bf16 %v227, %v227
    %s229 = scalar_lea.vmem %s2, 128
    %v230 = vld [vmem:[%s229] sm:$0xf]
    %v231 = vld [vmem:[%s229 + $0x4] sm:$0xf]
    %v232 = vld [vmem:[%s229 + $0x8] sm:$0xf]
    %v233 = vld [vmem:[%s229 + $0xc] sm:$0xf]
    %v234 = vld [vmem:[%s229 + $0x10] sm:$0xf]
    %v235 = vld [vmem:[%s229 + $0x14] sm:$0xf]
    %v236 = vld [vmem:[%s229 + $0x18] sm:$0xf]
    %v237 = vld [vmem:[%s229 + $0x1c] sm:$0xf]
    %v238 = vld [vmem:[%s229 + $0x20] sm:$0xf]
    %v239 = vld [vmem:[%s229 + $0x24] sm:$0xf]
    %v240 = vld [vmem:[%s229 + $0x28] sm:$0xf]
    %v241 = vld [vmem:[%s229 + $0x2c] sm:$0xf]
    %v242 = vld [vmem:[%s229 + $0x30] sm:$0xf]
    %v243 = vld [vmem:[%s229 + $0x34] sm:$0xf]
    %v244 = vld [vmem:[%s229 + $0x38] sm:$0xf]
    %v245 = vld [vmem:[%s229 + $0x3c] sm:$0xf]
    %s246 = scalar_lea.vmem %s3, 3
    %v247 = vld [vmem:[%s246] sm:$0x1]
    %v249 = vperm.slane %v247, 0
    %v267 = vunpack.c.l.b16 %v230
    %v268 = vunpack.c.l.b16 %v231
    %v269 = vunpack.c.l.b16 %v232
    %v270 = vunpack.c.l.b16 %v233
    %v271 = vunpack.c.l.b16 %v234
    %v272 = vunpack.c.l.b16 %v235
    %v273 = vunpack.c.l.b16 %v236
    %v274 = vunpack.c.l.b16 %v237
    %v275 = vunpack.c.l.b16 %v238
    %v276 = vunpack.c.l.b16 %v239
    %v277 = vunpack.c.l.b16 %v240
    %v278 = vunpack.c.l.b16 %v241
    %v279 = vunpack.c.l.b16 %v242
    %v280 = vunpack.c.l.b16 %v243
    %v281 = vunpack.c.l.b16 %v244
    %v282 = vunpack.c.l.b16 %v245
    %v283 = vpack.c.b16 %v268, %v267
    %v284 = vpack.c.b16 %v270, %v269
    %v285 = vpack.c.b16 %v272, %v271
    %v286 = vpack.c.b16 %v274, %v273
    %v287 = vpack.c.b16 %v276, %v275
    %v288 = vpack.c.b16 %v278, %v277
    %v289 = vpack.c.b16 %v280, %v279
    %v290 = vpack.c.b16 %v282, %v281
    %299 = vmatpush.bf16.msra.mxu0 %v290
    %300 = vmatpush.bf16.msra.mxu0 %v289
    %301 = vmatpush.bf16.msra.mxu0 %v288
    %302 = vmatpush.bf16.msra.mxu0 %v287
    %303 = vmatpush.bf16.msra.mxu0 %v286
    %304 = vmatpush.bf16.msra.mxu0 %v285
    %305 = vmatpush.bf16.msra.mxu0 %v284
    %306 = vmatpush.bf16.msra.mxu0 %v283
    %307 = vmatmul.bf16.gmra.mxu0 %v228
    %v308 = vpop.f32.mrf.mxu0
    %v309 = vadd.f32 %v249, %v308
    %v310 = vpop.f32.mrf.mxu0
    %311 = vdwg.mxu0
    %312 = vst [vmem:[#allocation2] sm:$0xff] %v309
    // Predicated region
    $region18: #{qnet_forward.1} parent=1 // pred_check
      _
    $region19: #{qnet_forward.1} parent=1 // pred_check_branch
      %314 = sbr.rel (0) target = $region21
    $region20: #{qnet_forward.1} parent=1 // pred_region
      %316 = vsyncadd [#allocation3], 0
      %s318 = sshll.u32 [#allocation2], 4
      %s319 = int_to_ptr.vmem [resolvable:$true] %s318
      %s320 = sshll.u32 %s4, 4
      %s321 = int_to_ptr.hbm [resolvable:$true] %s320
      %323 = dma.vmem_to_hbm [thread:$0]  %s319, 128, %s321, [#allocation3]
    $region21: #{qnet_forward.1} parent=1 // pred_fallthru
      _
    // Predicated region
    $region22: #{qnet_forward.1} parent=1 // pred_check
      _
    $region23: #{qnet_forward.1} parent=1 // pred_check_branch
      %325 = sbr.rel (0) target = $region25
    $region24: #{qnet_forward.1} parent=1 // pred_region
      %327 = dma.done [#allocation3], 128
    $region25: #{qnet_forward.1} parent=1 // pred_fallthru
      _
    %328 = vsyncpa [#allocation3], 1

</llo_original>
